<compile_context>
chip_gen: v7x
topology: tpu7x:2x2x1
jax: 0.10.0
libtpu: 0.0.40
codegen_flags: <defaults>
</compile_context>

<pallas_src>
import jax
import jax.numpy as jnp
from jax.experimental import pallas as pl
from jax.experimental.pallas import tpu as pltpu


def _mlp_kernel(x_ref, w1_ref, b1_ref, w2_ref, b2_ref, o_ref):
    # x_ref:  (2, TN)  feature-major batch tile in VMEM (batch on lane axis)
    # w1_ref: (2, 2)   fc1 weight in SMEM, PyTorch (out, in) layout
    # b1_ref: (2,)     fc1 bias in SMEM
    # w2_ref: (2, 2)   fc2 weight in SMEM, PyTorch (out, in) layout
    # b2_ref: (2,)     fc2 bias in SMEM
    # o_ref:  (2, TN)  feature-major output tile
    x0 = x_ref[0:1, :]  # (1, TN)
    x1 = x_ref[1:2, :]  # (1, TN)

    # fc1 + ReLU on the VPU via scalar broadcasts (MXU intentionally unused).
    h0 = jnp.maximum(w1_ref[0, 0] * x0 + w1_ref[0, 1] * x1 + b1_ref[0], 0.0)
    h1 = jnp.maximum(w1_ref[1, 0] * x0 + w1_ref[1, 1] * x1 + b1_ref[1], 0.0)

    # fc2 (lane-dense row stores).
    o_ref[0:1, :] = w2_ref[0, 0] * h0 + w2_ref[0, 1] * h1 + b2_ref[0]
    o_ref[1:2, :] = w2_ref[1, 0] * h0 + w2_ref[1, 1] * h1 + b2_ref[1]


def decision_tree_nn_forward(x, w1, b1, w2, b2, *, tn=512):
    """x: (B, 2). w1, w2: (2, 2) PyTorch-layout (out, in). b1, b2: (2,)."""
    B, F = x.shape
    assert F == 2
    x = x.astype(jnp.float32)

    # Lane-sized batch tile: tn must be a multiple of 128.
    assert tn % 128 == 0
    grid_n = pl.cdiv(B, tn)
    Bp = grid_n * tn

    # Feature-major layout: batch on the lane axis; zero-pad to a full tile.
    xt = x.T  # (2, B)
    if Bp != B:
        xt = jnp.pad(xt, ((0, 0), (0, Bp - B)))

    # Mem-bound: ~20 flops and 16 bytes moved per (padded) row.
    cost = pl.CostEstimate(
        flops=20 * Bp, transcendentals=0, bytes_accessed=16 * Bp
    )

    out_t = pl.pallas_call(
        _mlp_kernel,
        out_shape=jax.ShapeDtypeStruct((2, Bp), jnp.float32),
        grid_spec=pltpu.PrefetchScalarGridSpec(
            num_scalar_prefetch=0,
            grid=(grid_n,),
            in_specs=[
                # Batch-tiled activations: sublane dim (2) equals the full
                # array dim, lane dim tn is a multiple of 128 -> dense tiles.
                pl.BlockSpec((2, tn), lambda i: (0, i)),
                # Tiny fixed parameters: whole arrays in SMEM, read as scalars.
                pl.BlockSpec(memory_space=pltpu.MemorySpace.SMEM),
                pl.BlockSpec(memory_space=pltpu.MemorySpace.SMEM),
                pl.BlockSpec(memory_space=pltpu.MemorySpace.SMEM),
                pl.BlockSpec(memory_space=pltpu.MemorySpace.SMEM),
            ],
            out_specs=pl.BlockSpec((2, tn), lambda i: (0, i)),
        ),
        compiler_params=pltpu.CompilerParams(
            dimension_semantics=("parallel",),
        ),
        cost_estimate=cost,
    )(xt, w1.astype(jnp.float32), b1.astype(jnp.float32),
      w2.astype(jnp.float32), b2.astype(jnp.float32))

    # Strip batch padding and return in the PyTorch (B, 2) layout.
    return out_t[:, :B].T


if __name__ == "__main__":
    # Deterministic parameters, exactly as in DecisionTreeNN.__init__
    w1 = jnp.array([[100.0, 0.0], [0.0, 100.0]], dtype=jnp.float32)  # fc1.weight (out,in)
    b1 = jnp.array([0.0, 0.0], dtype=jnp.float32)                    # fc1.bias
    w2 = jnp.array([[0.0, 0.0], [1.0, 1.0]], dtype=jnp.float32)      # fc2.weight (out,in)
    b2 = jnp.array([0.0, -70.0], dtype=jnp.float32)                  # fc2.bias

    # Small deterministic input batch of 2-D points (batch need not divide tn).
    key = jax.random.PRNGKey(0)
    x = jax.random.normal(key, (8, 2), dtype=jnp.float32)

    out = decision_tree_nn_forward(x, w1, b1, w2, b2)
    out = jax.block_until_ready(out)

    # Pure-JAX reference check (same math as the PyTorch forward).
    h_ref = jnp.maximum(x @ w1.T + b1, 0.0)
    y_ref = h_ref @ w2.T + b2
    assert out.shape == y_ref.shape
    assert jnp.allclose(out, y_ref, rtol=1e-5, atol=1e-5), "mismatch vs reference"

    print("KERNEL_OK")
</pallas_src>

<mosaic_0001>
module attributes {stable_mosaic.version = 11 : i64} {
  func.func @_mlp_kernel(%arg0: i32, %arg1: memref<2x512xf32, #tpu.memory_space<vmem>>, %arg2: memref<2x2xf32, #tpu.memory_space<smem>>, %arg3: memref<2xf32, #tpu.memory_space<smem>>, %arg4: memref<2x2xf32, #tpu.memory_space<smem>>, %arg5: memref<2xf32, #tpu.memory_space<smem>>, %arg6: memref<2x512xf32, #tpu.memory_space<vmem>>) attributes {dimension_semantics = [#tpu.dimension_semantics<parallel>], iteration_bounds = array<i64: 1>, scalar_prefetch = 0 : i64, scratch_operands = 0 : i64, tpu.core_type = #tpu.core_type<tc>, window_params = [{transform_indices = @transform_0, window_bounds = array<i64: 2, 512>}, {transform_indices = @transform_1, window_bounds = array<i64: 2, 2>}, {transform_indices = @transform_2, window_bounds = array<i64: 2>}, {transform_indices = @transform_3, window_bounds = array<i64: 2, 2>}, {transform_indices = @transform_4, window_bounds = array<i64: 2>}, {transform_indices = @transform_5, window_bounds = array<i64: 2, 512>}]} {
    %c0 = arith.constant 0 : index
    %c0_0 = arith.constant 0 : index
    %0 = vector.load %arg1[%c0, %c0_0] : memref<2x512xf32, #tpu.memory_space<vmem>>, vector<1x512xf32>
    %c1 = arith.constant 1 : index
    %c0_1 = arith.constant 0 : index
    %1 = vector.load %arg1[%c1, %c0_1] : memref<2x512xf32, #tpu.memory_space<vmem>>, vector<1x512xf32>
    %c0_2 = arith.constant 0 : index
    %c0_3 = arith.constant 0 : index
    %2 = memref.load %arg2[%c0_2, %c0_3] : memref<2x2xf32, #tpu.memory_space<smem>>
    %3 = vector.broadcast %2 : f32 to vector<1x512xf32>
    %4 = arith.mulf %3, %0 : vector<1x512xf32>
    %c0_4 = arith.constant 0 : index
    %c1_5 = arith.constant 1 : index
    %5 = memref.load %arg2[%c0_4, %c1_5] : memref<2x2xf32, #tpu.memory_space<smem>>
    %6 = vector.broadcast %5 : f32 to vector<1x512xf32>
    %7 = arith.mulf %6, %1 : vector<1x512xf32>
    %8 = arith.addf %4, %7 : vector<1x512xf32>
    %c0_6 = arith.constant 0 : index
    %9 = memref.load %arg3[%c0_6] : memref<2xf32, #tpu.memory_space<smem>>
    %10 = vector.broadcast %9 : f32 to vector<1x512xf32>
    %11 = arith.addf %8, %10 : vector<1x512xf32>
    %cst = arith.constant 0.000000e+00 : f32
    %12 = vector.broadcast %cst : f32 to vector<1x512xf32>
    %13 = arith.maximumf %11, %12 : vector<1x512xf32>
    %c1_7 = arith.constant 1 : index
    %c0_8 = arith.constant 0 : index
    %14 = memref.load %arg2[%c1_7, %c0_8] : memref<2x2xf32, #tpu.memory_space<smem>>
    %15 = vector.broadcast %14 : f32 to vector<1x512xf32>
    %16 = arith.mulf %15, %0 : vector<1x512xf32>
    %c1_9 = arith.constant 1 : index
    %c1_10 = arith.constant 1 : index
    %17 = memref.load %arg2[%c1_9, %c1_10] : memref<2x2xf32, #tpu.memory_space<smem>>
    %18 = vector.broadcast %17 : f32 to vector<1x512xf32>
    %19 = arith.mulf %18, %1 : vector<1x512xf32>
    %20 = arith.addf %16, %19 : vector<1x512xf32>
    %c1_11 = arith.constant 1 : index
    %21 = memref.load %arg3[%c1_11] : memref<2xf32, #tpu.memory_space<smem>>
    %22 = vector.broadcast %21 : f32 to vector<1x512xf32>
    %23 = arith.addf %20, %22 : vector<1x512xf32>
    %cst_12 = arith.constant 0.000000e+00 : f32
    %24 = vector.broadcast %cst_12 : f32 to vector<1x512xf32>
    %25 = arith.maximumf %23, %24 : vector<1x512xf32>
    %c0_13 = arith.constant 0 : index
    %c0_14 = arith.constant 0 : index
    %26 = memref.load %arg4[%c0_13, %c0_14] : memref<2x2xf32, #tpu.memory_space<smem>>
    %27 = vector.broadcast %26 : f32 to vector<1x512xf32>
    %28 = arith.mulf %27, %13 : vector<1x512xf32>
    %c0_15 = arith.constant 0 : index
    %c1_16 = arith.constant 1 : index
    %29 = memref.load %arg4[%c0_15, %c1_16] : memref<2x2xf32, #tpu.memory_space<smem>>
    %30 = vector.broadcast %29 : f32 to vector<1x512xf32>
    %31 = arith.mulf %30, %25 : vector<1x512xf32>
    %32 = arith.addf %28, %31 : vector<1x512xf32>
    %c0_17 = arith.constant 0 : index
    %33 = memref.load %arg5[%c0_17] : memref<2xf32, #tpu.memory_space<smem>>
    %34 = vector.broadcast %33 : f32 to vector<1x512xf32>
    %35 = arith.addf %32, %34 : vector<1x512xf32>
    %c0_18 = arith.constant 0 : index
    %c0_19 = arith.constant 0 : index
    %36 = vector.load %arg6[%c0_18, %c0_19] : memref<2x512xf32, #tpu.memory_space<vmem>>, vector<1x512xf32>
    tpu.vector_store %arg6[%c0_18, %c0_19], %35 {strides = array<i32>} : memref<2x512xf32, #tpu.memory_space<vmem>>, vector<1x512xf32>,
    %c1_20 = arith.constant 1 : index
    %c0_21 = arith.constant 0 : index
    %37 = memref.load %arg4[%c1_20, %c0_21] : memref<2x2xf32, #tpu.memory_space<smem>>
    %38 = vector.broadcast %37 : f32 to vector<1x512xf32>
    %39 = arith.mulf %38, %13 : vector<1x512xf32>
    %c1_22 = arith.constant 1 : index
    %c1_23 = arith.constant 1 : index
    %40 = memref.load %arg4[%c1_22, %c1_23] : memref<2x2xf32, #tpu.memory_space<smem>>
    %41 = vector.broadcast %40 : f32 to vector<1x512xf32>
    %42 = arith.mulf %41, %25 : vector<1x512xf32>
    %43 = arith.addf %39, %42 : vector<1x512xf32>
    %c1_24 = arith.constant 1 : index
    %44 = memref.load %arg5[%c1_24] : memref<2xf32, #tpu.memory_space<smem>>
    %45 = vector.broadcast %44 : f32 to vector<1x512xf32>
    %46 = arith.addf %43, %45 : vector<1x512xf32>
    %c1_25 = arith.constant 1 : index
    %c0_26 = arith.constant 0 : index
    %47 = vector.load %arg6[%c1_25, %c0_26] : memref<2x512xf32, #tpu.memory_space<vmem>>, vector<1x512xf32>
    tpu.vector_store %arg6[%c1_25, %c0_26], %46 {strides = array<i32>} : memref<2x512xf32, #tpu.memory_space<vmem>>, vector<1x512xf32>,
    return
  }
  func.func @transform_0(%arg0: i32) -> (i32, i32) {
    %c0_i32 = arith.constant 0 : i32
    %c0_i32_0 = arith.constant 0 : i32
    return %c0_i32, %arg0 : i32, i32
  }
  func.func @transform_1(%arg0: i32) -> (i32, i32) {
    %c0_i32 = arith.constant 0 : i32
    %c0_i32_0 = arith.constant 0 : i32
    %c0_i32_1 = arith.constant 0 : i32
    return %c0_i32, %c0_i32_0 : i32, i32
  }
  func.func @transform_2(%arg0: i32) -> i32 {
    %c0_i32 = arith.constant 0 : i32
    %c0_i32_0 = arith.constant 0 : i32
    return %c0_i32 : i32
  }
  func.func @transform_3(%arg0: i32) -> (i32, i32) {
    %c0_i32 = arith.constant 0 : i32
    %c0_i32_0 = arith.constant 0 : i32
    %c0_i32_1 = arith.constant 0 : i32
    return %c0_i32, %c0_i32_0 : i32, i32
  }
  func.func @transform_4(%arg0: i32) -> i32 {
    %c0_i32 = arith.constant 0 : i32
    %c0_i32_0 = arith.constant 0 : i32
    return %c0_i32 : i32
  }
  func.func @transform_5(%arg0: i32) -> (i32, i32) {
    %c0_i32 = arith.constant 0 : i32
    %c0_i32_0 = arith.constant 0 : i32
    return %c0_i32, %arg0 : i32, i32
  }
}

</mosaic_0001>

<llo_original>
// kernel: tpu_custom_call.1
$region0: #{tpu_custom_call.1}
  #allocation0 [shape = 'u32[]', space=smem, size = 0x4, offset = 0x4, fixed_abs, tag = 'smem constant byte address 0x4 - core index']
  #allocation1 [shape = 'u32[144,128]{1,0:T(1,128)}', space=vmem, size = 0x12000, scoped, tag = 'internal scratch']
  %s0 = inlined_call_operand.hbm [shape: f32[2,512], index: 0, kind: input, shape index: {}]
  %s1 = inlined_call_operand.vmem [shape: f32[2,2], index: 1, kind: input, shape index: {}]
  %s2 = inlined_call_operand.vmem [shape: f32[2], index: 2, kind: input, shape index: {}]
  %s3 = inlined_call_operand.vmem [shape: f32[2,2], index: 3, kind: input, shape index: {}]
  %s4 = inlined_call_operand.vmem [shape: f32[2], index: 4, kind: input, shape index: {}]
  %s5 = inlined_call_operand.hbm [shape: f32[2,512], index: 5, kind: output, shape index: {}]
  %s6 = sld [smem:[#allocation0]]
  $region50: #{tpu_custom_call.1} parent=0
    _
  %s8 = ssub.s32 1, %s6
  %s9 = scalar_select 0, %s8, %s6
  $region1: #{tpu_custom_call.1} parent=0
    #allocation2 [shape = 'u8[4096]{0}', space=vmem, size = 0x1000, scoped, tag = 'input window, operand 0, single buffered']
    #allocation3 [shape = 's32[1]{0}', space=sflag, size = 0x4, scoped, tag = 'scoped memory for tpu_custom_call.1']
    #allocation4 [shape = 's32[1]{0}', space=sflag, size = 0x4, scoped, tag = 'scoped memory for tpu_custom_call.1']
    #allocation5 [shape = 's32[1]{0}', space=sflag, size = 0x4, scoped, tag = 'scoped memory for tpu_custom_call.1']
    #allocation6 [shape = 'u8[1024]{0}', space=smem, size = 0x400, scoped, tag = 'input window, operand 1, single buffered']
    #allocation7 [shape = 'u8[512]{0}', space=smem, size = 0x200, scoped, tag = 'input window, operand 2, single buffered']
    #allocation8 [shape = 's32[1]{0}', space=sflag, size = 0x4, scoped, tag = 'scoped memory for tpu_custom_call.1']
    #allocation9 [shape = 'u8[1024]{0}', space=smem, size = 0x400, scoped, tag = 'input window, operand 3, single buffered']
    #allocation10 [shape = 'u8[512]{0}', space=smem, size = 0x200, scoped, tag = 'input window, operand 4, single buffered']
    #allocation11 [shape = 's32[1]{0}', space=sflag, size = 0x4, scoped, tag = 'scoped memory for tpu_custom_call.1']
    #allocation12 [shape = 'u8[4096]{0}', space=vmem, size = 0x1000, scoped, tag = 'output window, operand 0, single buffered']
    %10 = vsyncpa [#allocation3], 0
    %11 = vsyncpa [#allocation5], 0
    %12 = vsyncpa [#allocation8], 0
    %13 = vsyncpa [#allocation11], 0
    %14 = vsyncpa [#allocation4], 0
    // Predicated region
    $region2: #{tpu_custom_call.1} parent=1 // pred_check
      _
    $region3: #{tpu_custom_call.1} parent=1 // pred_check_branch
      %16 = sbr.rel (0) target = $region5
    $region4: #{tpu_custom_call.1} parent=1 // pred_region
      %s18 = ssub.s32 128, 128
      %19 = vsyncadd [#allocation3], %s18
      %s21 = sshll.u32 [#allocation2], 4
      %s22 = int_to_ptr.vmem [resolvable:$true] %s21
      %24 = dma.hbm_to_vmem [thread:$0]  %s0, 128, %s22, [#allocation3]
    $region5: #{tpu_custom_call.1} parent=1 // pred_fallthru
      _
    // Predicated region
    $region6: #{tpu_custom_call.1} parent=1 // pred_check
      _
    $region7: #{tpu_custom_call.1} parent=1 // pred_check_branch
      %26 = sbr.rel (0) target = $region9
    $region8: #{tpu_custom_call.1} parent=1 // pred_region
      %s28 = ssub.s32 32, 32
      %29 = vsyncadd [#allocation5], %s28
      %s31 = sshll.u32 %s1, 4
      %s32 = int_to_ptr.vmem [resolvable:$true] %s31
      %34 = dma.vmem_to_smem %s32, 32, [#allocation6], [#allocation5]
    $region9: #{tpu_custom_call.1} parent=1 // pred_fallthru
      _
    // Predicated region
    $region10: #{tpu_custom_call.1} parent=1 // pred_check
      _
    $region11: #{tpu_custom_call.1} parent=1 // pred_check_branch
      %36 = sbr.rel (0) target = $region13
    $region12: #{tpu_custom_call.1} parent=1 // pred_region
      %s38 = ssub.s32 16, 16
      %39 = vsyncadd [#allocation8], %s38
      %s41 = sshll.u32 %s2, 4
      %s42 = int_to_ptr.vmem [resolvable:$true] %s41
      %44 = dma.vmem_to_smem %s42, 16, [#allocation7], [#allocation8]
    $region13: #{tpu_custom_call.1} parent=1 // pred_fallthru
      _
    // Predicated region
    $region14: #{tpu_custom_call.1} parent=1 // pred_check
      _
    $region15: #{tpu_custom_call.1} parent=1 // pred_check_branch
      %46 = sbr.rel (0) target = $region17
    $region16: #{tpu_custom_call.1} parent=1 // pred_region
      %s48 = ssub.s32 32, 32
      %49 = vsyncadd [#allocation8], %s48
      %s51 = sshll.u32 %s3, 4
      %s52 = int_to_ptr.vmem [resolvable:$true] %s51
      %54 = dma.vmem_to_smem %s52, 32, [#allocation9], [#allocation8]
    $region17: #{tpu_custom_call.1} parent=1 // pred_fallthru
      _
    // Predicated region
    $region18: #{tpu_custom_call.1} parent=1 // pred_check
      _
    $region19: #{tpu_custom_call.1} parent=1 // pred_check_branch
      %56 = sbr.rel (0) target = $region21
    $region20: #{tpu_custom_call.1} parent=1 // pred_region
      %s58 = ssub.s32 16, 16
      %59 = vsyncadd [#allocation11], %s58
      %s61 = sshll.u32 %s4, 4
      %s62 = int_to_ptr.vmem [resolvable:$true] %s61
      %64 = dma.vmem_to_smem %s62, 16, [#allocation10], [#allocation11]
    $region21: #{tpu_custom_call.1} parent=1 // pred_fallthru
      _
    // Predicated region
    $region22: #{tpu_custom_call.1} parent=1 // pred_check
      _
    $region23: #{tpu_custom_call.1} parent=1 // pred_check_branch
      %66 = sbr.rel (0) target = $region25
    $region24: #{tpu_custom_call.1} parent=1 // pred_region
      %67 = dma.done [#allocation3], 128
    $region25: #{tpu_custom_call.1} parent=1 // pred_fallthru
      _
    // Predicated region
    $region26: #{tpu_custom_call.1} parent=1 // pred_check
      _
    $region27: #{tpu_custom_call.1} parent=1 // pred_check_branch
      %69 = sbr.rel (0) target = $region29
    $region28: #{tpu_custom_call.1} parent=1 // pred_region
      %70 = dma.done [#allocation5], 32
    $region29: #{tpu_custom_call.1} parent=1 // pred_fallthru
      _
    // Predicated region
    $region30: #{tpu_custom_call.1} parent=1 // pred_check
      _
    $region31: #{tpu_custom_call.1} parent=1 // pred_check_branch
      %72 = sbr.rel (0) target = $region33
    $region32: #{tpu_custom_call.1} parent=1 // pred_region
      %73 = dma.done [#allocation8], 16
    $region33: #{tpu_custom_call.1} parent=1 // pred_fallthru
      _
    // Predicated region
    $region34: #{tpu_custom_call.1} parent=1 // pred_check
      _
    $region35: #{tpu_custom_call.1} parent=1 // pred_check_branch
      %75 = sbr.rel (0) target = $region37
    $region36: #{tpu_custom_call.1} parent=1 // pred_region
      %76 = dma.done [#allocation8], 32
    $region37: #{tpu_custom_call.1} parent=1 // pred_fallthru
      _
    // Predicated region
    $region38: #{tpu_custom_call.1} parent=1 // pred_check
      _
    $region39: #{tpu_custom_call.1} parent=1 // pred_check_branch
      %78 = sbr.rel (0) target = $region41
    $region40: #{tpu_custom_call.1} parent=1 // pred_region
      %79 = dma.done [#allocation11], 16
    $region41: #{tpu_custom_call.1} parent=1 // pred_fallthru
      _
    %80 = sfence
    %v81 = vld [vmem:[#allocation2] ss:$2 sm:$0xf]
    %s82 = scalar_lea.vmem [#allocation2], 1
    %v83 = vld [vmem:[%s82] ss:$2 sm:$0xf]
    %s84 = sld [smem:[#allocation6]]
    %v85 = vstv %s84
    %v86 = vmul.f32 %v85, %v81
    %s87 = sld [smem:[#allocation6 + $0x1]]
    %v88 = vstv %s87
    %v89 = vmul.f32 %v88, %v83
    %v90 = vadd.f32 %v86, %v89
    %s91 = sld [smem:[#allocation7]]
    %v92 = vstv %s91
    %v93 = vadd.f32 %v90, %v92
    %v94 = vmax.f32 %v93, 0.0
    %s95 = sld [smem:[#allocation6 + $0x80]]
    %v96 = vstv %s95
    %v97 = vmul.f32 %v96, %v81
    %s98 = sld [smem:[#allocation6 + $0x81]]
    %v99 = vstv %s98
    %v100 = vmul.f32 %v99, %v83
    %v101 = vadd.f32 %v97, %v100
    %s102 = sld [smem:[#allocation7 + $0x1]]
    %v103 = vstv %s102
    %v104 = vadd.f32 %v101, %v103
    %v105 = vmax.f32 %v104, 0.0
    %s106 = sld [smem:[#allocation9]]
    %v107 = vstv %s106
    %v108 = vmul.f32 %v107, %v94
    %s109 = sld [smem:[#allocation9 + $0x1]]
    %v110 = vstv %s109
    %v111 = vmul.f32 %v110, %v105
    %v112 = vadd.f32 %v108, %v111
    %s113 = sld [smem:[#allocation10]]
    %v114 = vstv %s113
    %v115 = vadd.f32 %v112, %v114
    %v116 = vlaneseq
    %vm117 = vcmp.ge.s32.totalorder %v116, 0
    %vm118 = vcmp.lt.s32.totalorder %v116, 512
    %vm119 = vmand %vm117, %vm118
    %120 = vst.msk [vmem:[#allocation12] ss:$2 sm:$0xf] %vm119, %v115
    %s121 = sld [smem:[#allocation9 + $0x80]]
    %v122 = vstv %s121
    %v123 = vmul.f32 %v122, %v94
    %s124 = sld [smem:[#allocation9 + $0x81]]
    %v125 = vstv %s124
    %v126 = vmul.f32 %v125, %v105
    %v127 = vadd.f32 %v123, %v126
    %s128 = sld [smem:[#allocation10 + $0x1]]
    %v129 = vstv %s128
    %v130 = vadd.f32 %v127, %v129
    %s131 = scalar_lea.vmem [#allocation12], 1
    %132 = vst.msk [vmem:[%s131] ss:$2 sm:$0xf] %vm119, %v130
    // Predicated region
    $region42: #{tpu_custom_call.1} parent=1 // pred_check
      _
    $region43: #{tpu_custom_call.1} parent=1 // pred_check_branch
      %134 = sbr.rel (0) target = $region45
    $region44: #{tpu_custom_call.1} parent=1 // pred_region
      %s136 = ssub.s32 128, 128
      %137 = vsyncadd [#allocation4], %s136
      %s139 = sshll.u32 [#allocation12], 4
      %s140 = int_to_ptr.vmem [resolvable:$true] %s139
      %142 = dma.vmem_to_hbm [thread:$0]  %s140, 128, %s5, [#allocation4]
    $region45: #{tpu_custom_call.1} parent=1 // pred_fallthru
      _
    // Predicated region
    $region46: #{tpu_custom_call.1} parent=1 // pred_check
      _
    $region47: #{tpu_custom_call.1} parent=1 // pred_check_branch
      %144 = sbr.rel (0) target = $region49
    $region48: #{tpu_custom_call.1} parent=1 // pred_region
      %145 = dma.done [#allocation4], 128
    $region49: #{tpu_custom_call.1} parent=1 // pred_fallthru
      _
    %146 = vsyncpa [#allocation3], 1
    %147 = vsyncpa [#allocation4], 1
    %148 = vsyncpa [#allocation5], 1
    %149 = vsyncpa [#allocation8], 1
    %150 = vsyncpa [#allocation11], 1

</llo_original>
